<compile_context>
chip_gen: v6e
topology: v6e:2x2x1
jax: 0.10.0
libtpu: 0.0.40
codegen_flags: <defaults>
</compile_context>

<pallas_src>
import jax
import jax.numpy as jnp
from jax.experimental import pallas as pl
from jax.experimental.pallas import tpu as pltpu

HEAD_WIDTH = 7   # 3 action logits + 3 food-dir + 1 reward
HEAD_PAD = 8     # padded head rows (sublane-aligned; 8th row/bias is zero)


def _round_up(n, m):
    return ((n + m - 1) // m) * m


def _tensorcores_per_chip():
    """2 on v7x (two TensorCores per chip), else 1 (v5e / v6e)."""
    try:
        kind = jax.devices()[0].device_kind.lower()
    except Exception:
        return 1
    return 2 if ("v7" in kind or "7x" in kind) else 1


def _local_agent_kernel(x_ref, w1_ref, b1_ref, w2_ref, b2_ref,
                        wht_ref, bht_ref, out_ref):
    """Fused 3-layer MLP forward for one batch tile; all in VMEM/vregs."""
    x = x_ref[...]                                                 # (tb, S) bf16

    h1 = jnp.dot(x, w1_ref[...], preferred_element_type=jnp.float32)
    h1 = jnp.maximum(h1 + b1_ref[...], 0.0)                        # (tb, H) f32

    feat = jnp.dot(h1.astype(w2_ref.dtype), w2_ref[...],
                   preferred_element_type=jnp.float32)
    feat = jnp.maximum(feat + b2_ref[...], 0.0)                    # (tb, H) f32

    # Fused heads, computed transposed: (8, H) @ (H, tb) -> (8, tb).
    # The (tb, H) -> (H, tb) f32 transpose is (8,128)-aligned (XLU) and keeps
    # the output store lane-dense along batch (32 B/row of f32 heads).
    feat_t = feat.T.astype(wht_ref.dtype)                          # (H, tb) bf16
    heads_t = jnp.dot(wht_ref[...], feat_t,
                      preferred_element_type=jnp.float32)          # (8, tb) f32
    out_ref[...] = (heads_t + bht_ref[...]).astype(out_ref.dtype)  # bias (8,1)


def local_agent_forward(x, params, *, batch_tile=2048):
    """Pallas forward pass of LocalAgent.

    x: (B, state_dim) f32 (or bf16)
    params: dict with bf16 weights stored as (in, out) for fc1/fc2, the three
            heads fused + transposed as w_head_t (8, H) bf16 / b_head_t (8, 1)
            f32 (row 7 is zero padding).
    returns (logits (B,3), pred_food_dir (B,3), pred_reward (B,1)) in f32.
    """
    B, S = x.shape
    H = params["w1"].shape[1]
    NH = params["w_head_t"].shape[0]            # 8 padded head rows

    # ---- batch tiling -------------------------------------------------------
    Bp = _round_up(B, 16)                       # bf16 x tiles: 16-row packing
    tb = min(batch_tile, Bp)
    if _tensorcores_per_chip() > 1 and Bp >= 2 * 128:
        # v7x only: two TensorCores; target >= 4 grid steps (2 per core) so
        # each core still double-buffers its x / out DMAs.
        tb = min(tb, max(128, _round_up(pl.cdiv(Bp, 4), 128)))
    if tb < Bp:
        # Balance the steps and keep tb a multiple of 128 so the (8, tb)
        # output block stays lane-dense (unmasked vst).
        steps = pl.cdiv(Bp, tb)
        tb = _round_up(pl.cdiv(Bp, steps), 128)
        Bp = _round_up(Bp, tb)
    grid = (Bp // tb,)

    xb = x.astype(jnp.bfloat16)
    if Bp != B:
        xb = jnp.pad(xb, ((0, Bp - B), (0, 0)))   # zero-pad tail rows

    weights = (params["w1"], params["b1"], params["w2"], params["b2"],
               params["w_head_t"], params["b_head_t"])

    flops = 2 * Bp * (S * H + H * H + H * NH)
    bytes_accessed = (xb.size * xb.dtype.itemsize
                      + sum(int(w.size) * w.dtype.itemsize for w in weights)
                      + NH * Bp * 4)             # transposed f32 head slab

    def run(weight_mode):
        def full_spec(arr):
            nd = arr.ndim
            kwargs = {} if weight_mode is None else {"pipeline_mode": weight_mode}
            return pl.BlockSpec(arr.shape, lambda i, _nd=nd: (0,) * _nd, **kwargs)

        in_specs = ([pl.BlockSpec((tb, S), lambda i: (i, 0))]     # x tile
                    + [full_spec(w) for w in weights])            # resident
        out_specs = pl.BlockSpec((NH, tb), lambda i: (0, i))      # (8, tb) f32

        return pl.pallas_call(
            _local_agent_kernel,
            out_shape=jax.ShapeDtypeStruct((NH, Bp), jnp.float32),
            grid_spec=pltpu.PrefetchScalarGridSpec(
                num_scalar_prefetch=0,
                grid=grid,
                in_specs=in_specs,
                out_specs=out_specs),
            compiler_params=pltpu.CompilerParams(
                dimension_semantics=("parallel",),
                vmem_limit_bytes=32 * 1024 * 1024),
            cost_estimate=pl.CostEstimate(
                flops=flops, transcendentals=0, bytes_accessed=bytes_accessed),
        )(xb, *weights)

    try:
        # Grid-invariant weights: single buffer (saves VMEM, no redundant DMA).
        heads_t = run(pl.Buffered(1))
    except Exception:
        # Fallback: default double buffering if Buffered(1) is rejected.
        heads_t = run(None)

    heads = heads_t[:, :B].T                     # (B, 8) f32
    return heads[:, 0:3], heads[:, 3:6], heads[:, 6:7]


def init_params(key, state_dim=8, hidden_dim=128):
    """Deterministic synthetic init matching nn.Linear shapes.

    fc1/fc2 weights stored transposed vs PyTorch: (in, out), cast to bf16;
    biases f32.  The three heads are fused and stored TRANSPOSED as
    w_head_t (8, hidden) bf16 / b_head_t (8, 1) f32 (row 7 zero-padded)."""
    ks = jax.random.split(key, 10)

    def linear(kw, kb, fan_in, fan_out):
        bound = 1.0 / jnp.sqrt(float(fan_in))
        w = jax.random.uniform(kw, (fan_in, fan_out), jnp.float32, -bound, bound)
        b = jax.random.uniform(kb, (1, fan_out), jnp.float32, -bound, bound)
        return w, b

    w1, b1 = linear(ks[0], ks[1], state_dim, hidden_dim)
    w2, b2 = linear(ks[2], ks[3], hidden_dim, hidden_dim)
    wa, ba = linear(ks[4], ks[5], hidden_dim, 3)
    wf, bf = linear(ks[6], ks[7], hidden_dim, 3)
    wr, br = linear(ks[8], ks[9], hidden_dim, 1)

    w_head = jnp.concatenate([wa, wf, wr], axis=1)                  # (H, 7)
    b_head = jnp.concatenate([ba, bf, br], axis=1)                  # (1, 7)
    pad = HEAD_PAD - HEAD_WIDTH
    w_head_t = jnp.pad(w_head.T, ((0, pad), (0, 0)))                # (8, H)
    b_head_t = jnp.pad(b_head.T, ((0, pad), (0, 0)))                # (8, 1)

    return dict(
        w1=w1.astype(jnp.bfloat16), b1=b1,
        w2=w2.astype(jnp.bfloat16), b2=b2,
        w_head_t=w_head_t.astype(jnp.bfloat16), b_head_t=b_head_t)


def reference_forward(x, p):
    """Pure-JAX reference with the kernel's exact dtype plan (bf16 storage,
    f32 accumulation, f32 outputs)."""
    xb = x.astype(jnp.bfloat16)
    h1 = jnp.maximum(
        jnp.dot(xb, p["w1"], preferred_element_type=jnp.float32) + p["b1"], 0.0)
    feat = jnp.maximum(
        jnp.dot(h1.astype(jnp.bfloat16), p["w2"],
                preferred_element_type=jnp.float32) + p["b2"], 0.0)
    heads = (jnp.dot(feat.astype(jnp.bfloat16), p["w_head_t"].T,
                     preferred_element_type=jnp.float32) + p["b_head_t"].T)
    return heads[:, 0:3], heads[:, 3:6], heads[:, 6:7]


if __name__ == "__main__":
    key = jax.random.PRNGKey(0)
    k_param, k_x = jax.random.split(key)

    state_dim, hidden_dim, batch = 8, 128, 64   # module defaults; small batch
    params = init_params(k_param, state_dim=state_dim, hidden_dim=hidden_dim)
    x = jax.random.normal(k_x, (batch, state_dim), jnp.float32)

    outs = jax.block_until_ready(local_agent_forward(x, params))
    logits, pred_food_dir, pred_reward = outs

    # Correctness check against pure-JAX reference with identical dtype plan.
    ref = reference_forward(x, params)
    for got, want in zip(outs, ref):
        assert got.shape == want.shape, (got.shape, want.shape)
        assert jnp.allclose(got, want, atol=1e-3, rtol=1e-3), \
            float(jnp.max(jnp.abs(got - want)))

    assert logits.shape == (batch, 3)
    assert pred_food_dir.shape == (batch, 3)
    assert pred_reward.shape == (batch, 1)

    print("KERNEL_OK")
</pallas_src>

<mosaic_0001>
module attributes {stable_mosaic.version = 11 : i64} {
  func.func @_local_agent_kernel(%arg0: i32, %arg1: memref<64x8xbf16, #tpu.memory_space<vmem>>, %arg2: memref<8x128xbf16, #tpu.memory_space<vmem>>, %arg3: memref<1x128xf32, #tpu.memory_space<vmem>>, %arg4: memref<128x128xbf16, #tpu.memory_space<vmem>>, %arg5: memref<1x128xf32, #tpu.memory_space<vmem>>, %arg6: memref<8x128xbf16, #tpu.memory_space<vmem>>, %arg7: memref<8x1xf32, #tpu.memory_space<vmem>>, %arg8: memref<8x64xf32, #tpu.memory_space<vmem>>) attributes {dimension_semantics = [#tpu.dimension_semantics<parallel>], iteration_bounds = array<i64: 1>, scalar_prefetch = 0 : i64, scratch_operands = 0 : i64, tpu.core_type = #tpu.core_type<tc>, window_params = [{transform_indices = @transform_0, window_bounds = array<i64: 64, 8>}, {pipeline_mode = #tpu.pipeline_mode<synchronous>, transform_indices = @transform_1, window_bounds = array<i64: 8, 128>}, {pipeline_mode = #tpu.pipeline_mode<synchronous>, transform_indices = @transform_2, window_bounds = array<i64: 1, 128>}, {pipeline_mode = #tpu.pipeline_mode<synchronous>, transform_indices = @transform_3, window_bounds = array<i64: 128, 128>}, {pipeline_mode = #tpu.pipeline_mode<synchronous>, transform_indices = @transform_4, window_bounds = array<i64: 1, 128>}, {pipeline_mode = #tpu.pipeline_mode<synchronous>, transform_indices = @transform_5, window_bounds = array<i64: 8, 128>}, {pipeline_mode = #tpu.pipeline_mode<synchronous>, transform_indices = @transform_6, window_bounds = array<i64: 8, 1>}, {transform_indices = @transform_7, window_bounds = array<i64: 8, 64>}]} {
    %c0 = arith.constant 0 : index
    %c0_0 = arith.constant 0 : index
    %0 = vector.load %arg1[%c0, %c0_0] : memref<64x8xbf16, #tpu.memory_space<vmem>>, vector<64x8xbf16>
    %c0_1 = arith.constant 0 : index
    %c0_2 = arith.constant 0 : index
    %1 = vector.load %arg2[%c0_1, %c0_2] : memref<8x128xbf16, #tpu.memory_space<vmem>>, vector<8x128xbf16>
    %cst = arith.constant dense<0.000000e+00> : vector<64x128xf32>
    %2 = tpu.matmul %0, %1, %cst {dimension_numbers = #tpu.dot_dimension_numbers<[1], [0], [0], [1], [0, 0, 1, 1], [], []>} : vector<64x8xbf16>, vector<8x128xbf16>, vector<64x128xf32> -> vector<64x128xf32>
    %c0_3 = arith.constant 0 : index
    %c0_4 = arith.constant 0 : index
    %3 = vector.load %arg3[%c0_3, %c0_4] : memref<1x128xf32, #tpu.memory_space<vmem>>, vector<1x128xf32>
    %4 = vector.broadcast %3 : vector<1x128xf32> to vector<64x128xf32>
    %5 = arith.addf %2, %4 : vector<64x128xf32>
    %cst_5 = arith.constant 0.000000e+00 : f32
    %6 = vector.broadcast %cst_5 : f32 to vector<64x128xf32>
    %7 = arith.maximumf %5, %6 : vector<64x128xf32>
    %8 = arith.truncf %7 : vector<64x128xf32> to vector<64x128xbf16>
    %c0_6 = arith.constant 0 : index
    %c0_7 = arith.constant 0 : index
    %9 = vector.load %arg4[%c0_6, %c0_7] : memref<128x128xbf16, #tpu.memory_space<vmem>>, vector<128x128xbf16>
    %cst_8 = arith.constant dense<0.000000e+00> : vector<64x128xf32>
    %10 = tpu.matmul %8, %9, %cst_8 {dimension_numbers = #tpu.dot_dimension_numbers<[1], [0], [0], [1], [0, 0, 1, 1], [], []>} : vector<64x128xbf16>, vector<128x128xbf16>, vector<64x128xf32> -> vector<64x128xf32>
    %c0_9 = arith.constant 0 : index
    %c0_10 = arith.constant 0 : index
    %11 = vector.load %arg5[%c0_9, %c0_10] : memref<1x128xf32, #tpu.memory_space<vmem>>, vector<1x128xf32>
    %12 = vector.broadcast %11 : vector<1x128xf32> to vector<64x128xf32>
    %13 = arith.addf %10, %12 : vector<64x128xf32>
    %cst_11 = arith.constant 0.000000e+00 : f32
    %14 = vector.broadcast %cst_11 : f32 to vector<64x128xf32>
    %15 = arith.maximumf %13, %14 : vector<64x128xf32>
    %16 = tpu.transpose %15, [1, 0] : vector<64x128xf32> -> vector<128x64xf32>
    %17 = arith.truncf %16 : vector<128x64xf32> to vector<128x64xbf16>
    %c0_12 = arith.constant 0 : index
    %c0_13 = arith.constant 0 : index
    %18 = vector.load %arg6[%c0_12, %c0_13] : memref<8x128xbf16, #tpu.memory_space<vmem>>, vector<8x128xbf16>
    %cst_14 = arith.constant dense<0.000000e+00> : vector<8x64xf32>
    %19 = tpu.matmul %18, %17, %cst_14 {dimension_numbers = #tpu.dot_dimension_numbers<[1], [0], [0], [1], [0, 0, 1, 1], [], []>} : vector<8x128xbf16>, vector<128x64xbf16>, vector<8x64xf32> -> vector<8x64xf32>
    %c0_15 = arith.constant 0 : index
    %c0_16 = arith.constant 0 : index
    %20 = vector.load %arg7[%c0_15, %c0_16] : memref<8x1xf32, #tpu.memory_space<vmem>>, vector<8x1xf32>
    %21 = vector.broadcast %20 : vector<8x1xf32> to vector<8x64xf32>
    %22 = arith.addf %19, %21 : vector<8x64xf32>
    %c0_17 = arith.constant 0 : index
    %c0_18 = arith.constant 0 : index
    %23 = vector.load %arg8[%c0_17, %c0_18] : memref<8x64xf32, #tpu.memory_space<vmem>>, vector<8x64xf32>
    tpu.vector_store %arg8[%c0_17, %c0_18], %22 {strides = array<i32>} : memref<8x64xf32, #tpu.memory_space<vmem>>, vector<8x64xf32>,
    return
  }
  func.func @transform_0(%arg0: i32) -> (i32, i32) {
    %c0_i32 = arith.constant 0 : i32
    %c0_i32_0 = arith.constant 0 : i32
    return %arg0, %c0_i32 : i32, i32
  }
  func.func @transform_1(%arg0: i32) -> (i32, i32) {
    %c0_i32 = arith.constant 0 : i32
    %c0_i32_0 = arith.constant 0 : i32
    %c0_i32_1 = arith.constant 0 : i32
    return %c0_i32, %c0_i32_0 : i32, i32
  }
  func.func @transform_2(%arg0: i32) -> (i32, i32) {
    %c0_i32 = arith.constant 0 : i32
    %c0_i32_0 = arith.constant 0 : i32
    %c0_i32_1 = arith.constant 0 : i32
    return %c0_i32, %c0_i32_0 : i32, i32
  }
  func.func @transform_3(%arg0: i32) -> (i32, i32) {
    %c0_i32 = arith.constant 0 : i32
    %c0_i32_0 = arith.constant 0 : i32
    %c0_i32_1 = arith.constant 0 : i32
    return %c0_i32, %c0_i32_0 : i32, i32
  }
  func.func @transform_4(%arg0: i32) -> (i32, i32) {
    %c0_i32 = arith.constant 0 : i32
    %c0_i32_0 = arith.constant 0 : i32
    %c0_i32_1 = arith.constant 0 : i32
    return %c0_i32, %c0_i32_0 : i32, i32
  }
  func.func @transform_5(%arg0: i32) -> (i32, i32) {
    %c0_i32 = arith.constant 0 : i32
    %c0_i32_0 = arith.constant 0 : i32
    %c0_i32_1 = arith.constant 0 : i32
    return %c0_i32, %c0_i32_0 : i32, i32
  }
  func.func @transform_6(%arg0: i32) -> (i32, i32) {
    %c0_i32 = arith.constant 0 : i32
    %c0_i32_0 = arith.constant 0 : i32
    %c0_i32_1 = arith.constant 0 : i32
    return %c0_i32, %c0_i32_0 : i32, i32
  }
  func.func @transform_7(%arg0: i32) -> (i32, i32) {
    %c0_i32 = arith.constant 0 : i32
    %c0_i32_0 = arith.constant 0 : i32
    return %c0_i32, %arg0 : i32, i32
  }
}

module attributes {stable_mosaic.version = 11 : i64} {
  func.func @_local_agent_kernel(%arg0: i32, %arg1: memref<64x8xbf16, #tpu.memory_space<vmem>>, %arg2: memref<8x128xbf16, #tpu.memory_space<vmem>>, %arg3: memref<1x128xf32, #tpu.memory_space<vmem>>, %arg4: memref<128x128xbf16, #tpu.memory_space<vmem>>, %arg5: memref<1x128xf32, #tpu.memory_space<vmem>>, %arg6: memref<8x128xbf16, #tpu.memory_space<vmem>>, %arg7: memref<8x1xf32, #tpu.memory_space<vmem>>, %arg8: memref<8x64xf32, #tpu.memory_space<vmem>>) attributes {dimension_semantics = [#tpu.dimension_semantics<parallel>], iteration_bounds = array<i64: 1>, scalar_prefetch = 0 : i64, scratch_operands = 0 : i64, tpu.core_type = #tpu.core_type<tc>, window_params = [{transform_indices = @transform_0, window_bounds = array<i64: 64, 8>}, {pipeline_mode = #tpu.pipeline_mode<synchronous>, transform_indices = @transform_1, window_bounds = array<i64: 8, 128>}, {pipeline_mode = #tpu.pipeline_mode<synchronous>, transform_indices = @transform_2, window_bounds = array<i64: 1, 128>}, {pipeline_mode = #tpu.pipeline_mode<synchronous>, transform_indices = @transform_3, window_bounds = array<i64: 128, 128>}, {pipeline_mode = #tpu.pipeline_mode<synchronous>, transform_indices = @transform_4, window_bounds = array<i64: 1, 128>}, {pipeline_mode = #tpu.pipeline_mode<synchronous>, transform_indices = @transform_5, window_bounds = array<i64: 8, 128>}, {pipeline_mode = #tpu.pipeline_mode<synchronous>, transform_indices = @transform_6, window_bounds = array<i64: 8, 1>}, {transform_indices = @transform_7, window_bounds = array<i64: 8, 64>}]} {
    %c0 = arith.constant 0 : index
    %c0_0 = arith.constant 0 : index
    %0 = vector.load %arg1[%c0, %c0_0] : memref<64x8xbf16, #tpu.memory_space<vmem>>, vector<64x8xbf16>
    %c0_1 = arith.constant 0 : index
    %c0_2 = arith.constant 0 : index
    %1 = vector.load %arg2[%c0_1, %c0_2] : memref<8x128xbf16, #tpu.memory_space<vmem>>, vector<8x128xbf16>
    %cst = arith.constant dense<0.000000e+00> : vector<64x128xf32>
    %2 = tpu.matmul %0, %1, %cst {dimension_numbers = #tpu.dot_dimension_numbers<[1], [0], [0], [1], [0, 0, 1, 1], [], []>} : vector<64x8xbf16>, vector<8x128xbf16>, vector<64x128xf32> -> vector<64x128xf32>
    %c0_3 = arith.constant 0 : index
    %c0_4 = arith.constant 0 : index
    %3 = vector.load %arg3[%c0_3, %c0_4] : memref<1x128xf32, #tpu.memory_space<vmem>>, vector<1x128xf32>
    %4 = vector.broadcast %3 : vector<1x128xf32> to vector<64x128xf32>
    %5 = arith.addf %2, %4 : vector<64x128xf32>
    %cst_5 = arith.constant 0.000000e+00 : f32
    %6 = vector.broadcast %cst_5 : f32 to vector<64x128xf32>
    %7 = arith.maximumf %5, %6 : vector<64x128xf32>
    %8 = arith.truncf %7 : vector<64x128xf32> to vector<64x128xbf16>
    %c0_6 = arith.constant 0 : index
    %c0_7 = arith.constant 0 : index
    %9 = vector.load %arg4[%c0_6, %c0_7] : memref<128x128xbf16, #tpu.memory_space<vmem>>, vector<128x128xbf16>
    %cst_8 = arith.constant dense<0.000000e+00> : vector<64x128xf32>
    %10 = tpu.matmul %8, %9, %cst_8 {dimension_numbers = #tpu.dot_dimension_numbers<[1], [0], [0], [1], [0, 0, 1, 1], [], []>} : vector<64x128xbf16>, vector<128x128xbf16>, vector<64x128xf32> -> vector<64x128xf32>
    %c0_9 = arith.constant 0 : index
    %c0_10 = arith.constant 0 : index
    %11 = vector.load %arg5[%c0_9, %c0_10] : memref<1x128xf32, #tpu.memory_space<vmem>>, vector<1x128xf32>
    %12 = vector.broadcast %11 : vector<1x128xf32> to vector<64x128xf32>
    %13 = arith.addf %10, %12 : vector<64x128xf32>
    %cst_11 = arith.constant 0.000000e+00 : f32
    %14 = vector.broadcast %cst_11 : f32 to vector<64x128xf32>
    %15 = arith.maximumf %13, %14 : vector<64x128xf32>
    %16 = tpu.transpose %15, [1, 0] : vector<64x128xf32> -> vector<128x64xf32>
    %17 = arith.truncf %16 : vector<128x64xf32> to vector<128x64xbf16>
    %c0_12 = arith.constant 0 : index
    %c0_13 = arith.constant 0 : index
    %18 = vector.load %arg6[%c0_12, %c0_13] : memref<8x128xbf16, #tpu.memory_space<vmem>>, vector<8x128xbf16>
    %cst_14 = arith.constant dense<0.000000e+00> : vector<8x64xf32>
    %19 = tpu.matmul %18, %17, %cst_14 {dimension_numbers = #tpu.dot_dimension_numbers<[1], [0], [0], [1], [0, 0, 1, 1], [], []>} : vector<8x128xbf16>, vector<128x64xbf16>, vector<8x64xf32> -> vector<8x64xf32>
    %c0_15 = arith.constant 0 : index
    %c0_16 = arith.constant 0 : index
    %20 = vector.load %arg7[%c0_15, %c0_16] : memref<8x1xf32, #tpu.memory_space<vmem>>, vector<8x1xf32>
    %21 = vector.broadcast %20 : vector<8x1xf32> to vector<8x64xf32>
    %22 = arith.addf %19, %21 : vector<8x64xf32>
    %c0_17 = arith.constant 0 : index
    %c0_18 = arith.constant 0 : index
    %23 = vector.load %arg8[%c0_17, %c0_18] : memref<8x64xf32, #tpu.memory_space<vmem>>, vector<8x64xf32>
    tpu.vector_store %arg8[%c0_17, %c0_18], %22 {strides = array<i32>} : memref<8x64xf32, #tpu.memory_space<vmem>>, vector<8x64xf32>,
    return
  }
  func.func @transform_0(%arg0: i32) -> (i32, i32) {
    %c0_i32 = arith.constant 0 : i32
    %c0_i32_0 = arith.constant 0 : i32
    return %arg0, %c0_i32 : i32, i32
  }
  func.func @transform_1(%arg0: i32) -> (i32, i32) {
    %c0_i32 = arith.constant 0 : i32
    %c0_i32_0 = arith.constant 0 : i32
    %c0_i32_1 = arith.constant 0 : i32
    return %c0_i32, %c0_i32_0 : i32, i32
  }
  func.func @transform_2(%arg0: i32) -> (i32, i32) {
    %c0_i32 = arith.constant 0 : i32
    %c0_i32_0 = arith.constant 0 : i32
    %c0_i32_1 = arith.constant 0 : i32
    return %c0_i32, %c0_i32_0 : i32, i32
  }
  func.func @transform_3(%arg0: i32) -> (i32, i32) {
    %c0_i32 = arith.constant 0 : i32
    %c0_i32_0 = arith.constant 0 : i32
    %c0_i32_1 = arith.constant 0 : i32
    return %c0_i32, %c0_i32_0 : i32, i32
  }
  func.func @transform_4(%arg0: i32) -> (i32, i32) {
    %c0_i32 = arith.constant 0 : i32
    %c0_i32_0 = arith.constant 0 : i32
    %c0_i32_1 = arith.constant 0 : i32
    return %c0_i32, %c0_i32_0 : i32, i32
  }
  func.func @transform_5(%arg0: i32) -> (i32, i32) {
    %c0_i32 = arith.constant 0 : i32
    %c0_i32_0 = arith.constant 0 : i32
    %c0_i32_1 = arith.constant 0 : i32
    return %c0_i32, %c0_i32_0 : i32, i32
  }
  func.func @transform_6(%arg0: i32) -> (i32, i32) {
    %c0_i32 = arith.constant 0 : i32
    %c0_i32_0 = arith.constant 0 : i32
    %c0_i32_1 = arith.constant 0 : i32
    return %c0_i32, %c0_i32_0 : i32, i32
  }
  func.func @transform_7(%arg0: i32) -> (i32, i32) {
    %c0_i32 = arith.constant 0 : i32
    %c0_i32_0 = arith.constant 0 : i32
    return %c0_i32, %arg0 : i32, i32
  }
}

</mosaic_0001>

<llo_original>
// kernel: tpu_custom_call.1
$region0: #{tpu_custom_call.1}
  #allocation0 [shape = 'u32[]', space=smem, size = 0x4, offset = 0x4, fixed_abs, tag = 'smem constant byte address 0x4 - core index']
  #allocation1 [shape = 'u32[144,128]{1,0:T(1,128)}', space=vmem, size = 0x12000, scoped, tag = 'internal scratch']
  %s0 = inlined_call_operand.vmem [shape: bf16[64,8], index: 0, kind: input, shape index: {}]
  %s1 = inlined_call_operand.vmem [shape: bf16[8,128], index: 1, kind: input, shape index: {}]
  %s2 = inlined_call_operand.vmem [shape: f32[1,128], index: 2, kind: input, shape index: {}]
  %s3 = inlined_call_operand.hbm [shape: bf16[128,128], index: 3, kind: input, shape index: {}]
  %s4 = inlined_call_operand.vmem [shape: f32[1,128], index: 4, kind: input, shape index: {}]
  %s5 = inlined_call_operand.vmem [shape: bf16[8,128], index: 5, kind: input, shape index: {}]
  %s6 = inlined_call_operand.vmem [shape: f32[8,1], index: 6, kind: input, shape index: {}]
  %s7 = inlined_call_operand.hbm [shape: f32[8,64], index: 7, kind: output, shape index: {}]
  %s8 = sld [smem:[#allocation0]]
  $region42: #{tpu_custom_call.1} parent=0
    _
  %s10 = ssub.s32 1, %s8
  %s11 = scalar_select 0, %s10, %s8
  $region1: #{tpu_custom_call.1} parent=0
    #allocation2 [shape = 'u8[32768]{0}', space=vmem, size = 0x8000, scoped, tag = 'input window, operand 3, single buffered']
    #allocation3 [shape = 's32[1]{0}', space=sflag, size = 0x4, scoped, tag = 'scoped memory for tpu_custom_call.1']
    #allocation4 [shape = 's32[1]{0}', space=sflag, size = 0x4, scoped, tag = 'scoped memory for tpu_custom_call.1']
    #allocation5 [shape = 'u8[4096]{0}', space=vmem, size = 0x1000, scoped, tag = 'output window, operand 0, single buffered']
    %12 = vsyncpa [#allocation3], 0
    %13 = vsyncpa [#allocation4], 0
    // Predicated region
    $region2: #{tpu_custom_call.1} parent=1 // pred_check
      _
    $region3: #{tpu_custom_call.1} parent=1 // pred_check_branch
      %15 = sbr.rel (0) target = $region5
    $region4: #{tpu_custom_call.1} parent=1 // pred_region
      _
    $region5: #{tpu_custom_call.1} parent=1 // pred_fallthru
      _
    // Predicated region
    $region6: #{tpu_custom_call.1} parent=1 // pred_check
      _
    $region7: #{tpu_custom_call.1} parent=1 // pred_check_branch
      %17 = sbr.rel (0) target = $region9
    $region8: #{tpu_custom_call.1} parent=1 // pred_region
      _
    $region9: #{tpu_custom_call.1} parent=1 // pred_fallthru
      _
    // Predicated region
    $region10: #{tpu_custom_call.1} parent=1 // pred_check
      _
    $region11: #{tpu_custom_call.1} parent=1 // pred_check_branch
      %19 = sbr.rel (0) target = $region13
    $region12: #{tpu_custom_call.1} parent=1 // pred_region
      _
    $region13: #{tpu_custom_call.1} parent=1 // pred_fallthru
      _
    // Predicated region
    $region14: #{tpu_custom_call.1} parent=1 // pred_check
      _
    $region15: #{tpu_custom_call.1} parent=1 // pred_check_branch
      %21 = sbr.rel (0) target = $region17
    $region16: #{tpu_custom_call.1} parent=1 // pred_region
      %s23 = ssub.s32 1024, 1024
      %24 = vsyncadd [#allocation3], %s23
      %s25 = sshll.u32 [#allocation2], 4
      %s26 = int_to_ptr.vmem [resolvable:$true] %s25
      %31 = dma.hbm_to_vmem [thread:$0]  %s3, 1024, %s26, [#allocation3], 64, 64, 4
    $region17: #{tpu_custom_call.1} parent=1 // pred_fallthru
      _
    // Predicated region
    $region18: #{tpu_custom_call.1} parent=1 // pred_check
      _
    $region19: #{tpu_custom_call.1} parent=1 // pred_check_branch
      %33 = sbr.rel (0) target = $region21
    $region20: #{tpu_custom_call.1} parent=1 // pred_region
      _
    $region21: #{tpu_custom_call.1} parent=1 // pred_fallthru
      _
    // Predicated region
    $region22: #{tpu_custom_call.1} parent=1 // pred_check
      _
    $region23: #{tpu_custom_call.1} parent=1 // pred_check_branch
      %35 = sbr.rel (0) target = $region25
    $region24: #{tpu_custom_call.1} parent=1 // pred_region
      _
    $region25: #{tpu_custom_call.1} parent=1 // pred_fallthru
      _
    // Predicated region
    $region26: #{tpu_custom_call.1} parent=1 // pred_check
      _
    $region27: #{tpu_custom_call.1} parent=1 // pred_check_branch
      %37 = sbr.rel (0) target = $region29
    $region28: #{tpu_custom_call.1} parent=1 // pred_region
      _
    $region29: #{tpu_custom_call.1} parent=1 // pred_fallthru
      _
    // Predicated region
    $region30: #{tpu_custom_call.1} parent=1 // pred_check
      _
    $region31: #{tpu_custom_call.1} parent=1 // pred_check_branch
      %39 = sbr.rel (0) target = $region33
    $region32: #{tpu_custom_call.1} parent=1 // pred_region
      %40 = dma.done [#allocation3], 1024
    $region33: #{tpu_custom_call.1} parent=1 // pred_fallthru
      _
    %v42 = vld [vmem:[%s0] sm:$0xf]
    %v43 = vld [vmem:[%s0 + $0x4] sm:$0xf]
    %v44 = vld [vmem:[%s0 + $0x8] sm:$0xf]
    %v45 = vld [vmem:[%s0 + $0xc] sm:$0xf]
    %v46 = vld [vmem:[%s0 + $0x10] sm:$0xf]
    %v47 = vld [vmem:[%s0 + $0x14] sm:$0xf]
    %v48 = vld [vmem:[%s0 + $0x18] sm:$0xf]
    %v49 = vld [vmem:[%s0 + $0x1c] sm:$0xf]
    %v50 = vld [vmem:[%s1] sm:$0xf]
    %v51 = vld [vmem:[%s2] sm:$0x1]
    %v53 = vlaneseq
    %v54 = vshrl.u32 %v53, 7
    %v55 = vsub.s32 0, %v54
    %v56 = vrot.slane %v51, %v55
    %v66 = vunpack.c.l.b16 %v42
    %v67 = vunpack.c.l.b16 %v43
    %v68 = vunpack.c.l.b16 %v44
    %v69 = vunpack.c.l.b16 %v45
    %v70 = vunpack.c.l.b16 %v46
    %v71 = vunpack.c.l.b16 %v47
    %v72 = vunpack.c.l.b16 %v48
    %v73 = vunpack.c.l.b16 %v49
    %v74 = vpack.c.b16 %v67, %v66
    %v75 = vpack.c.b16 %v69, %v68
    %v76 = vpack.c.b16 %v71, %v70
    %v77 = vpack.c.b16 %v73, %v72
    %vm78 = vcmask 64512
    %v80 = vsel %vm78, %v74, 0
    %v83 = vsel %vm78, %v75, 0
    %v86 = vsel %vm78, %v76, 0
    %v89 = vsel %vm78, %v77, 0
    %vm91 = vcmask 1043456
    %v93 = vsel %vm91, %v50, 0
    %95 = vmatprep.subr.bf16.mxu0 0
    %96 = vmatpush1.bf16.msra.mxu0 0
    %97 = vmatprep.subr.bf16.mxu0 0
    %98 = vmatpush1.bf16.msra.mxu0 0
    %99 = vmatprep.subr.bf16.mxu0 0
    %100 = vmatpush1.bf16.msra.mxu0 0
    %101 = vmatprep.subr.bf16.mxu0 0
    %102 = vmatpush1.bf16.msra.mxu0 0
    %103 = vmatprep.subr.bf16.mxu0 0
    %104 = vmatpush1.bf16.msra.mxu0 0
    %105 = vmatprep.subr.bf16.mxu0 0
    %106 = vmatpush1.bf16.msra.mxu0 0
    %107 = vmatprep.subr.bf16.mxu0 0
    %108 = vmatpush1.bf16.msra.mxu0 0
    %109 = vmatprep.subr.bf16.mxu0 0
    %110 = vmatpush1.bf16.msra.mxu0 %v93
    %111 = vmatprep.subr.bf16.mxu0 0
    %112 = vmatpush2.bf16.msra.mxu0 0
    %113 = vmatprep.subr.bf16.mxu0 0
    %114 = vmatpush2.bf16.msra.mxu0 0
    %115 = vmatprep.subr.bf16.mxu0 0
    %116 = vmatpush2.bf16.msra.mxu0 0
    %117 = vmatprep.subr.bf16.mxu0 0
    %118 = vmatpush2.bf16.msra.mxu0 0
    %119 = vmatprep.subr.bf16.mxu0 0
    %120 = vmatpush2.bf16.msra.mxu0 0
    %121 = vmatprep.subr.bf16.mxu0 0
    %122 = vmatpush2.bf16.msra.mxu0 0
    %123 = vmatprep.subr.bf16.mxu0 0
    %124 = vmatpush2.bf16.msra.mxu0 0
    %125 = vmatprep.subr.bf16.mxu0 0
    %126 = vmatpush2.bf16.msra.mxu0 0
    %127 = vmatprep.mubr.bf16.mxu0 0
    %128 = vmatmul.mubr.bf16.gmra.mxu0 %v80
    %v129 = vpop.f32.mrf.mxu0
    %v130 = vadd.f32 %v56, %v129
    %v131 = vpop.f32.mrf.mxu0
    %v132 = vpop.f32.mrf.mxu0
    %v133 = vadd.f32 %v56, %v132
    %v134 = vpop.f32.mrf.mxu0
    %135 = vmatprep.mubr.bf16.mxu0 0
    %136 = vmatmul.mubr.bf16.gmra.mxu0 %v83
    %v137 = vpop.f32.mrf.mxu0
    %v138 = vadd.f32 %v56, %v137
    %v139 = vpop.f32.mrf.mxu0
    %v140 = vpop.f32.mrf.mxu0
    %v141 = vadd.f32 %v56, %v140
    %v142 = vpop.f32.mrf.mxu0
    %143 = vmatprep.mubr.bf16.mxu0 0
    %144 = vmatmul.mubr.bf16.gmra.mxu0 %v86
    %v145 = vpop.f32.mrf.mxu0
    %v146 = vadd.f32 %v56, %v145
    %v147 = vpop.f32.mrf.mxu0
    %v148 = vpop.f32.mrf.mxu0
    %v149 = vadd.f32 %v56, %v148
    %v150 = vpop.f32.mrf.mxu0
    %151 = vmatprep.mubr.bf16.mxu0 0
    %152 = vmatmul.mubr.bf16.gmra.mxu0 %v89
    %v153 = vpop.f32.mrf.mxu0
    %v154 = vadd.f32 %v56, %v153
    %v155 = vpop.f32.mrf.mxu0
    %v156 = vpop.f32.mrf.mxu0
    %v157 = vadd.f32 %v56, %v156
    %v158 = vpop.f32.mrf.mxu0
    %159 = vdwg.mxu0
    %v160 = vmax.f32 %v130, 0.0
    %v161 = vmax.f32 %v133, 0.0
    %v162 = vmax.f32 %v138, 0.0
    %v163 = vmax.f32 %v141, 0.0
    %v164 = vmax.f32 %v146, 0.0
    %v165 = vmax.f32 %v149, 0.0
    %v166 = vmax.f32 %v154, 0.0
    %v167 = vmax.f32 %v157, 0.0
    %v168 = vpack.c.bf16 %v161, %v160
    %v169 = vpack.c.bf16 %v163, %v162
    %v170 = vpack.c.bf16 %v165, %v164
    %v171 = vpack.c.bf16 %v167, %v166
    %v172 = vld [vmem:[#allocation2] sm:$0xf]
    %v173 = vld [vmem:[#allocation2 + $0x4] sm:$0xf]
    %v174 = vld [vmem:[#allocation2 + $0x8] sm:$0xf]
    %v175 = vld [vmem:[#allocation2 + $0xc] sm:$0xf]
    %v176 = vld [vmem:[#allocation2 + $0x10] sm:$0xf]
    %v177 = vld [vmem:[#allocation2 + $0x14] sm:$0xf]
    %v178 = vld [vmem:[#allocation2 + $0x18] sm:$0xf]
    %v179 = vld [vmem:[#allocation2 + $0x1c] sm:$0xf]
    %v180 = vld [vmem:[#allocation2 + $0x20] sm:$0xf]
    %v181 = vld [vmem:[#allocation2 + $0x24] sm:$0xf]
    %v182 = vld [vmem:[#allocation2 + $0x28] sm:$0xf]
    %v183 = vld [vmem:[#allocation2 + $0x2c] sm:$0xf]
    %v184 = vld [vmem:[#allocation2 + $0x30] sm:$0xf]
    %v185 = vld [vmem:[#allocation2 + $0x34] sm:$0xf]
    %v186 = vld [vmem:[#allocation2 + $0x38] sm:$0xf]
    %v187 = vld [vmem:[#allocation2 + $0x3c] sm:$0xf]
    %v188 = vld [vmem:[%s4] sm:$0x1]
    %v190 = vlaneseq
    %v191 = vshrl.u32 %v190, 7
    %v192 = vsub.s32 0, %v191
    %v193 = vrot.slane %v188, %v192
    %v211 = vunpack.c.l.b16 %v172
    %v212 = vunpack.c.l.b16 %v173
    %v213 = vunpack.c.l.b16 %v174
    %v214 = vunpack.c.l.b16 %v175
    %v215 = vunpack.c.l.b16 %v176
    %v216 = vunpack.c.l.b16 %v177
    %v217 = vunpack.c.l.b16 %v178
    %v218 = vunpack.c.l.b16 %v179
    %v219 = vunpack.c.l.b16 %v180
    %v220 = vunpack.c.l.b16 %v181
    %v221 = vunpack.c.l.b16 %v182
    %v222 = vunpack.c.l.b16 %v183
    %v223 = vunpack.c.l.b16 %v184
    %v224 = vunpack.c.l.b16 %v185
    %v225 = vunpack.c.l.b16 %v186
    %v226 = vunpack.c.l.b16 %v187
    %v227 = vpack.c.b16 %v212, %v211
    %v228 = vpack.c.b16 %v214, %v213
    %v229 = vpack.c.b16 %v216, %v215
    %v230 = vpack.c.b16 %v218, %v217
    %v231 = vpack.c.b16 %v220, %v219
    %v232 = vpack.c.b16 %v222, %v221
    %v233 = vpack.c.b16 %v224, %v223
    %v234 = vpack.c.b16 %v226, %v225
    %243 = vmatprep.subr.bf16.mxu0 0
    %244 = vmatpush1.bf16.msra.mxu0 %v234
    %245 = vmatprep.subr.bf16.mxu0 0
    %246 = vmatpush1.bf16.msra.mxu0 %v233
    %247 = vmatprep.subr.bf16.mxu0 0
    %248 = vmatpush1.bf16.msra.mxu0 %v232
    %249 = vmatprep.subr.bf16.mxu0 0
    %250 = vmatpush1.bf16.msra.mxu0 %v231
    %251 = vmatprep.subr.bf16.mxu0 0
    %252 = vmatpush1.bf16.msra.mxu0 %v230
    %253 = vmatprep.subr.bf16.mxu0 0
    %254 = vmatpush1.bf16.msra.mxu0 %v229
    %255 = vmatprep.subr.bf16.mxu0 0
    %256 = vmatpush1.bf16.msra.mxu0 %v228
    %257 = vmatprep.subr.bf16.mxu0 0
    %258 = vmatpush1.bf16.msra.mxu0 %v227
    %259 = vmatprep.subr.bf16.mxu0 0
    %260 = vmatpush2.bf16.msra.mxu0 0
    %261 = vmatprep.subr.bf16.mxu0 0
    %262 = vmatpush2.bf16.msra.mxu0 0
    %263 = vmatprep.subr.bf16.mxu0 0
    %264 = vmatpush2.bf16.msra.mxu0 0
    %265 = vmatprep.subr.bf16.mxu0 0
    %266 = vmatpush2.bf16.msra.mxu0 0
    %267 = vmatprep.subr.bf16.mxu0 0
    %268 = vmatpush2.bf16.msra.mxu0 0
    %269 = vmatprep.subr.bf16.mxu0 0
    %270 = vmatpush2.bf16.msra.mxu0 0
    %271 = vmatprep.subr.bf16.mxu0 0
    %272 = vmatpush2.bf16.msra.mxu0 0
    %273 = vmatprep.subr.bf16.mxu0 0
    %274 = vmatpush2.bf16.msra.mxu0 0
    %275 = vmatprep.mubr.bf16.mxu0 0
    %276 = vmatmul.mubr.bf16.gmra.mxu0 %v168
    %v277 = vpop.f32.mrf.mxu0
    %v278 = vadd.f32 %v193, %v277
    %v279 = vpop.f32.mrf.mxu0
    %v280 = vpop.f32.mrf.mxu0
    %v281 = vadd.f32 %v193, %v280
    %v282 = vpop.f32.mrf.mxu0
    %283 = vmatprep.mubr.bf16.mxu0 0
    %284 = vmatmul.mubr.bf16.gmra.mxu0 %v169
    %v285 = vpop.f32.mrf.mxu0
    %v286 = vadd.f32 %v193, %v285
    %v287 = vpop.f32.mrf.mxu0
    %v288 = vpop.f32.mrf.mxu0
    %v289 = vadd.f32 %v193, %v288
    %v290 = vpop.f32.mrf.mxu0
    %291 = vmatprep.mubr.bf16.mxu0 0
    %292 = vmatmul.mubr.bf16.gmra.mxu0 %v170
    %v293 = vpop.f32.mrf.mxu0
    %v294 = vadd.f32 %v193, %v293
    %v295 = vpop.f32.mrf.mxu0
    %v296 = vpop.f32.mrf.mxu0
    %v297 = vadd.f32 %v193, %v296
    %v298 = vpop.f32.mrf.mxu0
    %299 = vmatprep.mubr.bf16.mxu0 0
    %300 = vmatmul.mubr.bf16.gmra.mxu0 %v171
    %v301 = vpop.f32.mrf.mxu0
    %v302 = vadd.f32 %v193, %v301
    %v303 = vpop.f32.mrf.mxu0
    %v304 = vpop.f32.mrf.mxu0
    %v305 = vadd.f32 %v193, %v304
    %v306 = vpop.f32.mrf.mxu0
    %307 = vdwg.mxu0
    %v308 = vmax.f32 %v278, 0.0
    %v309 = vmax.f32 %v281, 0.0
    %v310 = vmax.f32 %v286, 0.0
    %v311 = vmax.f32 %v289, 0.0
    %v312 = vmax.f32 %v294, 0.0
    %v313 = vmax.f32 %v297, 0.0
    %v314 = vmax.f32 %v302, 0.0
    %v315 = vmax.f32 %v305, 0.0
    %316 = vxpose.xlu0.b32.start [1/16] %v308, 128
    %317 = vxpose.xlu0.b32.cont [2/16] %v309, 128
    %318 = vxpose.xlu0.b32.cont [3/16] %v310, 128
    %319 = vxpose.xlu0.b32.cont [4/16] %v311, 128
    %320 = vxpose.xlu0.b32.cont [5/16] %v312, 128
    %321 = vxpose.xlu0.b32.cont [6/16] %v313, 128
    %322 = vxpose.xlu0.b32.cont [7/16] %v314, 128
    %323 = vxpose.xlu0.b32.cont [8/16] %v315, 128
    %324 = vxpose.xlu0.b32.cont [9/16] 0.0, 128
    %325 = vxpose.xlu0.b32.cont [10/16] 0.0, 128
    %326 = vxpose.xlu0.b32.cont [11/16] 0.0, 128
    %327 = vxpose.xlu0.b32.cont [12/16] 0.0, 128
    %328 = vxpose.xlu0.b32.cont [13/16] 0.0, 128
    %329 = vxpose.xlu0.b32.cont [14/16] 0.0, 128
    %330 = vxpose.xlu0.b32.cont [15/16] 0.0, 128
    %331 = vxpose.xlu0.b32.end [16/16] 0.0, 128
    %v332 = vpop.trf.xlu0
    %v333 = vpop.trf.xlu0
    %v334 = vpop.trf.xlu0
    %v335 = vpop.trf.xlu0
    %v336 = vpop.trf.xlu0
    %v337 = vpop.trf.xlu0
    %v338 = vpop.trf.xlu0
    %v339 = vpop.trf.xlu0
    %v340 = vpop.trf.xlu0
    %v341 = vpop.trf.xlu0
    %v342 = vpop.trf.xlu0
    %v343 = vpop.trf.xlu0
    %v344 = vpop.trf.xlu0
    %v345 = vpop.trf.xlu0
    %v346 = vpop.trf.xlu0
    %v347 = vpop.trf.xlu0
    %v348 = vpack.c.bf16 %v333, %v332
    %v349 = vpack.c.bf16 %v335, %v334
    %v350 = vpack.c.bf16 %v337, %v336
    %v351 = vpack.c.bf16 %v339, %v338
    %v352 = vpack.c.bf16 %v341, %v340
    %v353 = vpack.c.bf16 %v343, %v342
    %v354 = vpack.c.bf16 %v345, %v344
    %v355 = vpack.c.bf16 %v347, %v346
    %v356 = vld [vmem:[%s5] sm:$0xf]
    %v357 = vld [vmem:[%s6] sm:$0xff]
    %359 = vset.pattern.permute.xlu0 0
    %360 = vperm.xlu0 %359, %v357
    %v361 = vpop.permute.xlu0 %360
    %363 = vmatprep.subr.bf16.mxu0 0
    %364 = vmatpush1.bf16.msra.mxu0 %v355
    %365 = vmatprep.subr.bf16.mxu0 0
    %366 = vmatpush1.bf16.msra.mxu0 %v354
    %367 = vmatprep.subr.bf16.mxu0 0
    %368 = vmatpush1.bf16.msra.mxu0 %v353
    %369 = vmatprep.subr.bf16.mxu0 0
    %370 = vmatpush1.bf16.msra.mxu0 %v352
    %371 = vmatprep.subr.bf16.mxu0 0
    %372 = vmatpush1.bf16.msra.mxu0 %v351
    %373 = vmatprep.subr.bf16.mxu0 0
    %374 = vmatpush1.bf16.msra.mxu0 %v350
    %375 = vmatprep.subr.bf16.mxu0 0
    %376 = vmatpush1.bf16.msra.mxu0 %v349
    %377 = vmatprep.subr.bf16.mxu0 0
    %378 = vmatpush1.bf16.msra.mxu0 %v348
    %379 = vmatprep.subr.bf16.mxu0 0
    %380 = vmatpush2.bf16.msra.mxu0 0
    %381 = vmatprep.subr.bf16.mxu0 0
    %382 = vmatpush2.bf16.msra.mxu0 0
    %383 = vmatprep.subr.bf16.mxu0 0
    %384 = vmatpush2.bf16.msra.mxu0 0
    %385 = vmatprep.subr.bf16.mxu0 0
    %386 = vmatpush2.bf16.msra.mxu0 0
    %387 = vmatprep.subr.bf16.mxu0 0
    %388 = vmatpush2.bf16.msra.mxu0 0
    %389 = vmatprep.subr.bf16.mxu0 0
    %390 = vmatpush2.bf16.msra.mxu0 0
    %391 = vmatprep.subr.bf16.mxu0 0
    %392 = vmatpush2.bf16.msra.mxu0 0
    %393 = vmatprep.subr.bf16.mxu0 0
    %394 = vmatpush2.bf16.msra.mxu0 0
    %395 = vmatprep.mubr.bf16.mxu0 0
    %396 = vmatmul.mubr.bf16.gmra.mxu0 %v356
    %v397 = vpop.f32.mrf.mxu0
    %v398 = vadd.f32 %v361, %v397
    %v399 = vpop.f32.mrf.mxu0
    %v400 = vpop.f32.mrf.mxu0
    %v401 = vpop.f32.mrf.mxu0
    %402 = vdwg.mxu0
    %vm403 = vcmask 523264
    %404 = vst.msk [vmem:[#allocation5] sm:$0xff] %vm403, %v398
    // Predicated region
    $region34: #{tpu_custom_call.1} parent=1 // pred_check
      _
    $region35: #{tpu_custom_call.1} parent=1 // pred_check_branch
      %406 = sbr.rel (0) target = $region37
    $region36: #{tpu_custom_call.1} parent=1 // pred_region
      %s408 = ssub.s32 128, 128
      %409 = vsyncadd [#allocation4], %s408
      %s411 = sshll.u32 [#allocation5], 4
      %s412 = int_to_ptr.vmem [resolvable:$true] %s411
      %414 = dma.vmem_to_hbm [thread:$0]  %s412, 128, %s7, [#allocation4]
    $region37: #{tpu_custom_call.1} parent=1 // pred_fallthru
      _
    // Predicated region
    $region38: #{tpu_custom_call.1} parent=1 // pred_check
      _
    $region39: #{tpu_custom_call.1} parent=1 // pred_check_branch
      %416 = sbr.rel (0) target = $region41
    $region40: #{tpu_custom_call.1} parent=1 // pred_region
      %417 = dma.done [#allocation4], 128
    $region41: #{tpu_custom_call.1} parent=1 // pred_fallthru
      _
    %418 = vsyncpa [#allocation3], 1
    %419 = vsyncpa [#allocation4], 1

// kernel: tpu_custom_call.1
$region0: #{tpu_custom_call.1}
  #allocation0 [shape = 'u32[]', space=smem, size = 0x4, offset = 0x4, fixed_abs, tag = 'smem constant byte address 0x4 - core index']
  #allocation1 [shape = 'u32[144,128]{1,0:T(1,128)}', space=vmem, size = 0x12000, scoped, tag = 'internal scratch']
  %s0 = inlined_call_operand.vmem [shape: bf16[64,8], index: 0, kind: input, shape index: {}]
  %s1 = inlined_call_operand.vmem [shape: bf16[8,128], index: 1, kind: input, shape index: {}]
  %s2 = inlined_call_operand.vmem [shape: f32[1,128], index: 2, kind: input, shape index: {}]
  %s3 = inlined_call_operand.hbm [shape: bf16[128,128], index: 3, kind: input, shape index: {}]
  %s4 = inlined_call_operand.vmem [shape: f32[1,128], index: 4, kind: input, shape index: {}]
  %s5 = inlined_call_operand.vmem [shape: bf16[8,128], index: 5, kind: input, shape index: {}]
  %s6 = inlined_call_operand.vmem [shape: f32[8,1], index: 6, kind: input, shape index: {}]
  %s7 = inlined_call_operand.hbm [shape: f32[8,64], index: 7, kind: output, shape index: {}]
  %s8 = sld [smem:[#allocation0]]
  $region42: #{tpu_custom_call.1} parent=0
    _
  %s10 = ssub.s32 1, %s8
  %s11 = scalar_select 0, %s10, %s8
  $region1: #{tpu_custom_call.1} parent=0
    #allocation2 [shape = 'u8[32768]{0}', space=vmem, size = 0x8000, scoped, tag = 'input window, operand 3, single buffered']
    #allocation3 [shape = 's32[1]{0}', space=sflag, size = 0x4, scoped, tag = 'scoped memory for tpu_custom_call.1']
    #allocation4 [shape = 's32[1]{0}', space=sflag, size = 0x4, scoped, tag = 'scoped memory for tpu_custom_call.1']
    #allocation5 [shape = 'u8[4096]{0}', space=vmem, size = 0x1000, scoped, tag = 'output window, operand 0, single buffered']
    %12 = vsyncpa [#allocation3], 0
    %13 = vsyncpa [#allocation4], 0
    // Predicated region
    $region2: #{tpu_custom_call.1} parent=1 // pred_check
      _
    $region3: #{tpu_custom_call.1} parent=1 // pred_check_branch
      %15 = sbr.rel (0) target = $region5
    $region4: #{tpu_custom_call.1} parent=1 // pred_region
      _
    $region5: #{tpu_custom_call.1} parent=1 // pred_fallthru
      _
    // Predicated region
    $region6: #{tpu_custom_call.1} parent=1 // pred_check
      _
    $region7: #{tpu_custom_call.1} parent=1 // pred_check_branch
      %17 = sbr.rel (0) target = $region9
    $region8: #{tpu_custom_call.1} parent=1 // pred_region
      _
    $region9: #{tpu_custom_call.1} parent=1 // pred_fallthru
      _
    // Predicated region
    $region10: #{tpu_custom_call.1} parent=1 // pred_check
      _
    $region11: #{tpu_custom_call.1} parent=1 // pred_check_branch
      %19 = sbr.rel (0) target = $region13
    $region12: #{tpu_custom_call.1} parent=1 // pred_region
      _
    $region13: #{tpu_custom_call.1} parent=1 // pred_fallthru
      _
    // Predicated region
    $region14: #{tpu_custom_call.1} parent=1 // pred_check
      _
    $region15: #{tpu_custom_call.1} parent=1 // pred_check_branch
      %21 = sbr.rel (0) target = $region17
    $region16: #{tpu_custom_call.1} parent=1 // pred_region
      %s23 = ssub.s32 1024, 1024
      %24 = vsyncadd [#allocation3], %s23
      %s25 = sshll.u32 [#allocation2], 4
      %s26 = int_to_ptr.vmem [resolvable:$true] %s25
      %31 = dma.hbm_to_vmem [thread:$0]  %s3, 1024, %s26, [#allocation3], 64, 64, 4
    $region17: #{tpu_custom_call.1} parent=1 // pred_fallthru
      _
    // Predicated region
    $region18: #{tpu_custom_call.1} parent=1 // pred_check
      _
    $region19: #{tpu_custom_call.1} parent=1 // pred_check_branch
      %33 = sbr.rel (0) target = $region21
    $region20: #{tpu_custom_call.1} parent=1 // pred_region
      _
    $region21: #{tpu_custom_call.1} parent=1 // pred_fallthru
      _
    // Predicated region
    $region22: #{tpu_custom_call.1} parent=1 // pred_check
      _
    $region23: #{tpu_custom_call.1} parent=1 // pred_check_branch
      %35 = sbr.rel (0) target = $region25
    $region24: #{tpu_custom_call.1} parent=1 // pred_region
      _
    $region25: #{tpu_custom_call.1} parent=1 // pred_fallthru
      _
    // Predicated region
    $region26: #{tpu_custom_call.1} parent=1 // pred_check
      _
    $region27: #{tpu_custom_call.1} parent=1 // pred_check_branch
      %37 = sbr.rel (0) target = $region29
    $region28: #{tpu_custom_call.1} parent=1 // pred_region
      _
    $region29: #{tpu_custom_call.1} parent=1 // pred_fallthru
      _
    // Predicated region
    $region30: #{tpu_custom_call.1} parent=1 // pred_check
      _
    $region31: #{tpu_custom_call.1} parent=1 // pred_check_branch
      %39 = sbr.rel (0) target = $region33
    $region32: #{tpu_custom_call.1} parent=1 // pred_region
      %40 = dma.done [#allocation3], 1024
    $region33: #{tpu_custom_call.1} parent=1 // pred_fallthru
      _
    %v42 = vld [vmem:[%s0] sm:$0xf]
    %v43 = vld [vmem:[%s0 + $0x4] sm:$0xf]
    %v44 = vld [vmem:[%s0 + $0x8] sm:$0xf]
    %v45 = vld [vmem:[%s0 + $0xc] sm:$0xf]
    %v46 = vld [vmem:[%s0 + $0x10] sm:$0xf]
    %v47 = vld [vmem:[%s0 + $0x14] sm:$0xf]
    %v48 = vld [vmem:[%s0 + $0x18] sm:$0xf]
    %v49 = vld [vmem:[%s0 + $0x1c] sm:$0xf]
    %v50 = vld [vmem:[%s1] sm:$0xf]
    %v51 = vld [vmem:[%s2] sm:$0x1]
    %v53 = vlaneseq
    %v54 = vshrl.u32 %v53, 7
    %v55 = vsub.s32 0, %v54
    %v56 = vrot.slane %v51, %v55
    %v66 = vunpack.c.l.b16 %v42
    %v67 = vunpack.c.l.b16 %v43
    %v68 = vunpack.c.l.b16 %v44
    %v69 = vunpack.c.l.b16 %v45
    %v70 = vunpack.c.l.b16 %v46
    %v71 = vunpack.c.l.b16 %v47
    %v72 = vunpack.c.l.b16 %v48
    %v73 = vunpack.c.l.b16 %v49
    %v74 = vpack.c.b16 %v67, %v66
    %v75 = vpack.c.b16 %v69, %v68
    %v76 = vpack.c.b16 %v71, %v70
    %v77 = vpack.c.b16 %v73, %v72
    %vm78 = vcmask 64512
    %v80 = vsel %vm78, %v74, 0
    %v83 = vsel %vm78, %v75, 0
    %v86 = vsel %vm78, %v76, 0
    %v89 = vsel %vm78, %v77, 0
    %vm91 = vcmask 1043456
    %v93 = vsel %vm91, %v50, 0
    %95 = vmatprep.subr.bf16.mxu0 0
    %96 = vmatpush1.bf16.msra.mxu0 0
    %97 = vmatprep.subr.bf16.mxu0 0
    %98 = vmatpush1.bf16.msra.mxu0 0
    %99 = vmatprep.subr.bf16.mxu0 0
    %100 = vmatpush1.bf16.msra.mxu0 0
    %101 = vmatprep.subr.bf16.mxu0 0
    %102 = vmatpush1.bf16.msra.mxu0 0
    %103 = vmatprep.subr.bf16.mxu0 0
    %104 = vmatpush1.bf16.msra.mxu0 0
    %105 = vmatprep.subr.bf16.mxu0 0
    %106 = vmatpush1.bf16.msra.mxu0 0
    %107 = vmatprep.subr.bf16.mxu0 0
    %108 = vmatpush1.bf16.msra.mxu0 0
    %109 = vmatprep.subr.bf16.mxu0 0
    %110 = vmatpush1.bf16.msra.mxu0 %v93
    %111 = vmatprep.subr.bf16.mxu0 0
    %112 = vmatpush2.bf16.msra.mxu0 0
    %113 = vmatprep.subr.bf16.mxu0 0
    %114 = vmatpush2.bf16.msra.mxu0 0
    %115 = vmatprep.subr.bf16.mxu0 0
    %116 = vmatpush2.bf16.msra.mxu0 0
    %117 = vmatprep.subr.bf16.mxu0 0
    %118 = vmatpush2.bf16.msra.mxu0 0
    %119 = vmatprep.subr.bf16.mxu0 0
    %120 = vmatpush2.bf16.msra.mxu0 0
    %121 = vmatprep.subr.bf16.mxu0 0
    %122 = vmatpush2.bf16.msra.mxu0 0
    %123 = vmatprep.subr.bf16.mxu0 0
    %124 = vmatpush2.bf16.msra.mxu0 0
    %125 = vmatprep.subr.bf16.mxu0 0
    %126 = vmatpush2.bf16.msra.mxu0 0
    %127 = vmatprep.mubr.bf16.mxu0 0
    %128 = vmatmul.mubr.bf16.gmra.mxu0 %v80
    %v129 = vpop.f32.mrf.mxu0
    %v130 = vadd.f32 %v56, %v129
    %v131 = vpop.f32.mrf.mxu0
    %v132 = vpop.f32.mrf.mxu0
    %v133 = vadd.f32 %v56, %v132
    %v134 = vpop.f32.mrf.mxu0
    %135 = vmatprep.mubr.bf16.mxu0 0
    %136 = vmatmul.mubr.bf16.gmra.mxu0 %v83
    %v137 = vpop.f32.mrf.mxu0
    %v138 = vadd.f32 %v56, %v137
    %v139 = vpop.f32.mrf.mxu0
    %v140 = vpop.f32.mrf.mxu0
    %v141 = vadd.f32 %v56, %v140
    %v142 = vpop.f32.mrf.mxu0
    %143 = vmatprep.mubr.bf16.mxu0 0
    %144 = vmatmul.mubr.bf16.gmra.mxu0 %v86
    %v145 = vpop.f32.mrf.mxu0
    %v146 = vadd.f32 %v56, %v145
    %v147 = vpop.f32.mrf.mxu0
    %v148 = vpop.f32.mrf.mxu0
    %v149 = vadd.f32 %v56, %v148
    %v150 = vpop.f32.mrf.mxu0
    %151 = vmatprep.mubr.bf16.mxu0 0
    %152 = vmatmul.mubr.bf16.gmra.mxu0 %v89
    %v153 = vpop.f32.mrf.mxu0
    %v154 = vadd.f32 %v56, %v153
    %v155 = vpop.f32.mrf.mxu0
    %v156 = vpop.f32.mrf.mxu0
    %v157 = vadd.f32 %v56, %v156
    %v158 = vpop.f32.mrf.mxu0
    %159 = vdwg.mxu0
    %v160 = vmax.f32 %v130, 0.0
    %v161 = vmax.f32 %v133, 0.0
    %v162 = vmax.f32 %v138, 0.0
    %v163 = vmax.f32 %v141, 0.0
    %v164 = vmax.f32 %v146, 0.0
    %v165 = vmax.f32 %v149, 0.0
    %v166 = vmax.f32 %v154, 0.0
    %v167 = vmax.f32 %v157, 0.0
    %v168 = vpack.c.bf16 %v161, %v160
    %v169 = vpack.c.bf16 %v163, %v162
    %v170 = vpack.c.bf16 %v165, %v164
    %v171 = vpack.c.bf16 %v167, %v166
    %v172 = vld [vmem:[#allocation2] sm:$0xf]
    %v173 = vld [vmem:[#allocation2 + $0x4] sm:$0xf]
    %v174 = vld [vmem:[#allocation2 + $0x8] sm:$0xf]
    %v175 = vld [vmem:[#allocation2 + $0xc] sm:$0xf]
    %v176 = vld [vmem:[#allocation2 + $0x10] sm:$0xf]
    %v177 = vld [vmem:[#allocation2 + $0x14] sm:$0xf]
    %v178 = vld [vmem:[#allocation2 + $0x18] sm:$0xf]
    %v179 = vld [vmem:[#allocation2 + $0x1c] sm:$0xf]
    %v180 = vld [vmem:[#allocation2 + $0x20] sm:$0xf]
    %v181 = vld [vmem:[#allocation2 + $0x24] sm:$0xf]
    %v182 = vld [vmem:[#allocation2 + $0x28] sm:$0xf]
    %v183 = vld [vmem:[#allocation2 + $0x2c] sm:$0xf]
    %v184 = vld [vmem:[#allocation2 + $0x30] sm:$0xf]
    %v185 = vld [vmem:[#allocation2 + $0x34] sm:$0xf]
    %v186 = vld [vmem:[#allocation2 + $0x38] sm:$0xf]
    %v187 = vld [vmem:[#allocation2 + $0x3c] sm:$0xf]
    %v188 = vld [vmem:[%s4] sm:$0x1]
    %v190 = vlaneseq
    %v191 = vshrl.u32 %v190, 7
    %v192 = vsub.s32 0, %v191
    %v193 = vrot.slane %v188, %v192
    %v211 = vunpack.c.l.b16 %v172
    %v212 = vunpack.c.l.b16 %v173
    %v213 = vunpack.c.l.b16 %v174
    %v214 = vunpack.c.l.b16 %v175
    %v215 = vunpack.c.l.b16 %v176
    %v216 = vunpack.c.l.b16 %v177
    %v217 = vunpack.c.l.b16 %v178
    %v218 = vunpack.c.l.b16 %v179
    %v219 = vunpack.c.l.b16 %v180
    %v220 = vunpack.c.l.b16 %v181
    %v221 = vunpack.c.l.b16 %v182
    %v222 = vunpack.c.l.b16 %v183
    %v223 = vunpack.c.l.b16 %v184
    %v224 = vunpack.c.l.b16 %v185
    %v225 = vunpack.c.l.b16 %v186
    %v226 = vunpack.c.l.b16 %v187
    %v227 = vpack.c.b16 %v212, %v211
    %v228 = vpack.c.b16 %v214, %v213
    %v229 = vpack.c.b16 %v216, %v215
    %v230 = vpack.c.b16 %v218, %v217
    %v231 = vpack.c.b16 %v220, %v219
    %v232 = vpack.c.b16 %v222, %v221
    %v233 = vpack.c.b16 %v224, %v223
    %v234 = vpack.c.b16 %v226, %v225
    %243 = vmatprep.subr.bf16.mxu0 0
    %244 = vmatpush1.bf16.msra.mxu0 %v234
    %245 = vmatprep.subr.bf16.mxu0 0
    %246 = vmatpush1.bf16.msra.mxu0 %v233
    %247 = vmatprep.subr.bf16.mxu0 0
    %248 = vmatpush1.bf16.msra.mxu0 %v232
    %249 = vmatprep.subr.bf16.mxu0 0
    %250 = vmatpush1.bf16.msra.mxu0 %v231
    %251 = vmatprep.subr.bf16.mxu0 0
    %252 = vmatpush1.bf16.msra.mxu0 %v230
    %253 = vmatprep.subr.bf16.mxu0 0
    %254 = vmatpush1.bf16.msra.mxu0 %v229
    %255 = vmatprep.subr.bf16.mxu0 0
    %256 = vmatpush1.bf16.msra.mxu0 %v228
    %257 = vmatprep.subr.bf16.mxu0 0
    %258 = vmatpush1.bf16.msra.mxu0 %v227
    %259 = vmatprep.subr.bf16.mxu0 0
    %260 = vmatpush2.bf16.msra.mxu0 0
    %261 = vmatprep.subr.bf16.mxu0 0
    %262 = vmatpush2.bf16.msra.mxu0 0
    %263 = vmatprep.subr.bf16.mxu0 0
    %264 = vmatpush2.bf16.msra.mxu0 0
    %265 = vmatprep.subr.bf16.mxu0 0
    %266 = vmatpush2.bf16.msra.mxu0 0
    %267 = vmatprep.subr.bf16.mxu0 0
    %268 = vmatpush2.bf16.msra.mxu0 0
    %269 = vmatprep.subr.bf16.mxu0 0
    %270 = vmatpush2.bf16.msra.mxu0 0
    %271 = vmatprep.subr.bf16.mxu0 0
    %272 = vmatpush2.bf16.msra.mxu0 0
    %273 = vmatprep.subr.bf16.mxu0 0
    %274 = vmatpush2.bf16.msra.mxu0 0
    %275 = vmatprep.mubr.bf16.mxu0 0
    %276 = vmatmul.mubr.bf16.gmra.mxu0 %v168
    %v277 = vpop.f32.mrf.mxu0
    %v278 = vadd.f32 %v193, %v277
    %v279 = vpop.f32.mrf.mxu0
    %v280 = vpop.f32.mrf.mxu0
    %v281 = vadd.f32 %v193, %v280
    %v282 = vpop.f32.mrf.mxu0
    %283 = vmatprep.mubr.bf16.mxu0 0
    %284 = vmatmul.mubr.bf16.gmra.mxu0 %v169
    %v285 = vpop.f32.mrf.mxu0
    %v286 = vadd.f32 %v193, %v285
    %v287 = vpop.f32.mrf.mxu0
    %v288 = vpop.f32.mrf.mxu0
    %v289 = vadd.f32 %v193, %v288
    %v290 = vpop.f32.mrf.mxu0
    %291 = vmatprep.mubr.bf16.mxu0 0
    %292 = vmatmul.mubr.bf16.gmra.mxu0 %v170
    %v293 = vpop.f32.mrf.mxu0
    %v294 = vadd.f32 %v193, %v293
    %v295 = vpop.f32.mrf.mxu0
    %v296 = vpop.f32.mrf.mxu0
    %v297 = vadd.f32 %v193, %v296
    %v298 = vpop.f32.mrf.mxu0
    %299 = vmatprep.mubr.bf16.mxu0 0
    %300 = vmatmul.mubr.bf16.gmra.mxu0 %v171
    %v301 = vpop.f32.mrf.mxu0
    %v302 = vadd.f32 %v193, %v301
    %v303 = vpop.f32.mrf.mxu0
    %v304 = vpop.f32.mrf.mxu0
    %v305 = vadd.f32 %v193, %v304
    %v306 = vpop.f32.mrf.mxu0
    %307 = vdwg.mxu0
    %v308 = vmax.f32 %v278, 0.0
    %v309 = vmax.f32 %v281, 0.0
    %v310 = vmax.f32 %v286, 0.0
    %v311 = vmax.f32 %v289, 0.0
    %v312 = vmax.f32 %v294, 0.0
    %v313 = vmax.f32 %v297, 0.0
    %v314 = vmax.f32 %v302, 0.0
    %v315 = vmax.f32 %v305, 0.0
    %316 = vxpose.xlu0.b32.start [1/16] %v308, 128
    %317 = vxpose.xlu0.b32.cont [2/16] %v309, 128
    %318 = vxpose.xlu0.b32.cont [3/16] %v310, 128
    %319 = vxpose.xlu0.b32.cont [4/16] %v311, 128
    %320 = vxpose.xlu0.b32.cont [5/16] %v312, 128
    %321 = vxpose.xlu0.b32.cont [6/16] %v313, 128
    %322 = vxpose.xlu0.b32.cont [7/16] %v314, 128
    %323 = vxpose.xlu0.b32.cont [8/16] %v315, 128
    %324 = vxpose.xlu0.b32.cont [9/16] 0.0, 128
    %325 = vxpose.xlu0.b32.cont [10/16] 0.0, 128
    %326 = vxpose.xlu0.b32.cont [11/16] 0.0, 128
    %327 = vxpose.xlu0.b32.cont [12/16] 0.0, 128
    %328 = vxpose.xlu0.b32.cont [13/16] 0.0, 128
    %329 = vxpose.xlu0.b32.cont [14/16] 0.0, 128
    %330 = vxpose.xlu0.b32.cont [15/16] 0.0, 128
    %331 = vxpose.xlu0.b32.end [16/16] 0.0, 128
    %v332 = vpop.trf.xlu0
    %v333 = vpop.trf.xlu0
    %v334 = vpop.trf.xlu0
    %v335 = vpop.trf.xlu0
    %v336 = vpop.trf.xlu0
    %v337 = vpop.trf.xlu0
    %v338 = vpop.trf.xlu0
    %v339 = vpop.trf.xlu0
    %v340 = vpop.trf.xlu0
    %v341 = vpop.trf.xlu0
    %v342 = vpop.trf.xlu0
    %v343 = vpop.trf.xlu0
    %v344 = vpop.trf.xlu0
    %v345 = vpop.trf.xlu0
    %v346 = vpop.trf.xlu0
    %v347 = vpop.trf.xlu0
    %v348 = vpack.c.bf16 %v333, %v332
    %v349 = vpack.c.bf16 %v335, %v334
    %v350 = vpack.c.bf16 %v337, %v336
    %v351 = vpack.c.bf16 %v339, %v338
    %v352 = vpack.c.bf16 %v341, %v340
    %v353 = vpack.c.bf16 %v343, %v342
    %v354 = vpack.c.bf16 %v345, %v344
    %v355 = vpack.c.bf16 %v347, %v346
    %v356 = vld [vmem:[%s5] sm:$0xf]
    %v357 = vld [vmem:[%s6] sm:$0xff]
    %359 = vset.pattern.permute.xlu0 0
    %360 = vperm.xlu0 %359, %v357
    %v361 = vpop.permute.xlu0 %360
    %363 = vmatprep.subr.bf16.mxu0 0
    %364 = vmatpush1.bf16.msra.mxu0 %v355
    %365 = vmatprep.subr.bf16.mxu0 0
    %366 = vmatpush1.bf16.msra.mxu0 %v354
    %367 = vmatprep.subr.bf16.mxu0 0
    %368 = vmatpush1.bf16.msra.mxu0 %v353
    %369 = vmatprep.subr.bf16.mxu0 0
    %370 = vmatpush1.bf16.msra.mxu0 %v352
    %371 = vmatprep.subr.bf16.mxu0 0
    %372 = vmatpush1.bf16.msra.mxu0 %v351
    %373 = vmatprep.subr.bf16.mxu0 0
    %374 = vmatpush1.bf16.msra.mxu0 %v350
    %375 = vmatprep.subr.bf16.mxu0 0
    %376 = vmatpush1.bf16.msra.mxu0 %v349
    %377 = vmatprep.subr.bf16.mxu0 0
    %378 = vmatpush1.bf16.msra.mxu0 %v348
    %379 = vmatprep.subr.bf16.mxu0 0
    %380 = vmatpush2.bf16.msra.mxu0 0
    %381 = vmatprep.subr.bf16.mxu0 0
    %382 = vmatpush2.bf16.msra.mxu0 0
    %383 = vmatprep.subr.bf16.mxu0 0
    %384 = vmatpush2.bf16.msra.mxu0 0
    %385 = vmatprep.subr.bf16.mxu0 0
    %386 = vmatpush2.bf16.msra.mxu0 0
    %387 = vmatprep.subr.bf16.mxu0 0
    %388 = vmatpush2.bf16.msra.mxu0 0
    %389 = vmatprep.subr.bf16.mxu0 0
    %390 = vmatpush2.bf16.msra.mxu0 0
    %391 = vmatprep.subr.bf16.mxu0 0
    %392 = vmatpush2.bf16.msra.mxu0 0
    %393 = vmatprep.subr.bf16.mxu0 0
    %394 = vmatpush2.bf16.msra.mxu0 0
    %395 = vmatprep.mubr.bf16.mxu0 0
    %396 = vmatmul.mubr.bf16.gmra.mxu0 %v356
    %v397 = vpop.f32.mrf.mxu0
    %v398 = vadd.f32 %v361, %v397
    %v399 = vpop.f32.mrf.mxu0
    %v400 = vpop.f32.mrf.mxu0
    %v401 = vpop.f32.mrf.mxu0
    %402 = vdwg.mxu0
    %vm403 = vcmask 523264
    %404 = vst.msk [vmem:[#allocation5] sm:$0xff] %vm403, %v398
    // Predicated region
    $region34: #{tpu_custom_call.1} parent=1 // pred_check
      _
    $region35: #{tpu_custom_call.1} parent=1 // pred_check_branch
      %406 = sbr.rel (0) target = $region37
    $region36: #{tpu_custom_call.1} parent=1 // pred_region
      %s408 = ssub.s32 128, 128
      %409 = vsyncadd [#allocation4], %s408
      %s411 = sshll.u32 [#allocation5], 4
      %s412 = int_to_ptr.vmem [resolvable:$true] %s411
      %414 = dma.vmem_to_hbm [thread:$0]  %s412, 128, %s7, [#allocation4]
    $region37: #{tpu_custom_call.1} parent=1 // pred_fallthru
      _
    // Predicated region
    $region38: #{tpu_custom_call.1} parent=1 // pred_check
      _
    $region39: #{tpu_custom_call.1} parent=1 // pred_check_branch
      %416 = sbr.rel (0) target = $region41
    $region40: #{tpu_custom_call.1} parent=1 // pred_region
      %417 = dma.done [#allocation4], 128
    $region41: #{tpu_custom_call.1} parent=1 // pred_fallthru
      _
    %418 = vsyncpa [#allocation3], 1
    %419 = vsyncpa [#allocation4], 1

</llo_original>
